<compile_context>
chip_gen: v7x
topology: tpu7x:2x2x1
jax: 0.10.0
libtpu: 0.0.40
codegen_flags: <defaults>
</compile_context>

<pallas_src>
import functools

import jax
import jax.numpy as jnp
from jax.experimental import pallas as pl
from jax.experimental.pallas import tpu as pltpu


def _round_up(x, m):
    return (x + m - 1) // m * m


def _ffn_kernel(x_ref, w1_ref, b1_ref, w2_ref, b2_ref, o_ref, acc_ref, *,
                tile_h: int, h_tail: int):
    """One (row-tile, hidden-tile) step of the fused FFN.

    x_ref  : (TM, D)   token-row tile
    w1_ref : (D, TH)   hidden-dim chunk of W1
    b1_ref : (1, TH)   hidden-dim chunk of b1
    w2_ref : (TH, D)   hidden-dim chunk of W2
    b2_ref : (1, D)
    o_ref  : (TM, D)
    acc_ref: (TM, D) f32 VMEM accumulator, resident across the hidden axis
    """
    h_idx = pl.program_id(1)
    n_h = pl.num_programs(1)

    @pl.when(h_idx == 0)
    def _init():
        acc_ref[...] = jnp.zeros_like(acc_ref)

    # Linear 1 (hidden chunk) + bias + ReLU; f32 accumulation on the MXU.
    h = jnp.dot(x_ref[...], w1_ref[...],
                preferred_element_type=jnp.float32) + b1_ref[...]
    h = jnp.maximum(h, 0.0)

    w2 = w2_ref[...]
    if h_tail:
        # Ragged last hidden block: zero the invalid activation columns AND the
        # matching (unspecified-content) W2 rows so they contribute exactly 0.
        n_valid = jnp.where(h_idx == n_h - 1, h_tail, tile_h)
        col = jax.lax.broadcasted_iota(jnp.int32, h.shape, 1)
        h = jnp.where(col < n_valid, h, 0.0)
        row = jax.lax.broadcasted_iota(jnp.int32, w2.shape, 0)
        w2 = jnp.where(row < n_valid, w2, jnp.zeros_like(w2))

    # Dropout: identity in eval/inference mode.
    # Linear 2 partial product, accumulated over hidden-dim chunks.
    acc_ref[...] += jnp.dot(h.astype(w2.dtype), w2,
                            preferred_element_type=jnp.float32)

    @pl.when(h_idx == n_h - 1)
    def _finalize():
        # b2 added exactly once, at finalize.
        o_ref[...] = (acc_ref[...] + b2_ref[...]).astype(o_ref.dtype)


@functools.partial(jax.jit, static_argnames=("tile_m", "tile_h"))
def positionwise_feed_forward(x, w1, b1, w2, b2, *, tile_m=512, tile_h=512):
    """x: (B, L, D) -> (B, L, D). FFN applied independently per position."""
    B, L, D = x.shape
    H = w1.shape[1]
    n_rows = B * L
    x2d = x.reshape(n_rows, D)

    isz = jnp.dtype(x.dtype).itemsize
    wsz = jnp.dtype(w1.dtype).itemsize
    # Sublane packing for the activation dtype (f32: 8, bf16: 16, int8/fp8: 32).
    sub = {4: 8, 2: 16, 1: 32}[isz]

    # Token-row tile: big (MXU-friendly), rounded to sublane packing. No jnp.pad:
    # the ragged last row block's OOB reads only affect rows whose writes are clipped.
    if n_rows <= tile_m:
        tm = _round_up(n_rows, sub)
    else:
        tm = max(sub, (tile_m // sub) * sub)

    # Hidden-dim tile: lane-aligned (multiple of 128) unless H fits entirely.
    if H <= tile_h:
        th = H
        h_tail = 0
    else:
        th = max(128, (tile_h // 128) * 128)
        h_tail = H % th

    grid = (pl.cdiv(n_rows, tm), pl.cdiv(H, th))

    # VMEM budget: double-buffered input/output blocks + f32 accumulator scratch,
    # with headroom; capped below v7x's 64 MiB physical VMEM.
    vmem_need = (
        2 * (tm * D * isz)              # x tile (double-buffered)
        + 2 * (tm * D * isz)            # out tile
        + 2 * (D * th + th * D) * wsz   # W1/W2 hidden chunks
        + 2 * (th + D) * wsz            # biases
        + tm * D * 4                    # f32 accumulator scratch
    )
    vmem_limit = max(32 << 20, min(int(vmem_need * 1.25) + (2 << 20), 56 << 20))

    cost = pl.CostEstimate(
        flops=4 * n_rows * D * H,   # two matmuls: 2*rows*D*H each
        transcendentals=0,
        bytes_accessed=(2 * n_rows * D * isz
                        + grid[0] * (w1.size + w2.size + b1.size + b2.size) * wsz),
    )

    kernel = functools.partial(_ffn_kernel, tile_h=th, h_tail=h_tail)

    out2d = pl.pallas_call(
        kernel,
        out_shape=jax.ShapeDtypeStruct((n_rows, D), x.dtype),
        grid_spec=pltpu.PrefetchScalarGridSpec(
            num_scalar_prefetch=0,
            grid=grid,
            in_specs=[
                pl.BlockSpec((tm, D), lambda i, h: (i, 0)),   # x row tile
                pl.BlockSpec((D, th), lambda i, h: (0, h)),   # W1 hidden chunk
                pl.BlockSpec((1, th), lambda i, h: (0, h)),   # b1 hidden chunk
                pl.BlockSpec((th, D), lambda i, h: (h, 0)),   # W2 hidden chunk
                pl.BlockSpec((1, D), lambda i, h: (0, 0)),    # b2
            ],
            out_specs=pl.BlockSpec((tm, D), lambda i, h: (i, 0)),
            scratch_shapes=[pltpu.VMEM((tm, D), jnp.float32)],
        ),
        compiler_params=pltpu.CompilerParams(
            dimension_semantics=("parallel", "arbitrary"),
            vmem_limit_bytes=vmem_limit,
        ),
        cost_estimate=cost,
    )(x2d, w1, b1, w2, b2)

    return out2d.reshape(B, L, D)


def init_params(key, in_dim, hidden_dim, dtype=jnp.float32):
    """Deterministic init mimicking torch.nn.Linear default (U[-1/sqrt(fan_in), +])."""
    k1, k2, k3, k4 = jax.random.split(key, 4)
    bound1 = 1.0 / (in_dim ** 0.5)
    bound2 = 1.0 / (hidden_dim ** 0.5)
    w1 = jax.random.uniform(k1, (in_dim, hidden_dim), dtype, -bound1, bound1)
    b1 = jax.random.uniform(k2, (1, hidden_dim), dtype, -bound1, bound1)
    w2 = jax.random.uniform(k3, (hidden_dim, in_dim), dtype, -bound2, bound2)
    b2 = jax.random.uniform(k4, (1, in_dim), dtype, -bound2, bound2)
    return w1, b1, w2, b2


if __name__ == "__main__":
    key = jax.random.PRNGKey(0)
    kx, kp, kx2, kp2 = jax.random.split(key, 4)

    # TODO(synk): Dropout is implemented as identity (eval-mode); training-mode
    # dropout would need pltpu.prng_seed/prng_random_bits masks in-kernel.

    # Small demo consistent with the module's (B, L, D) layout.
    B, L, D, H = 2, 8, 16, 32
    x = jax.random.normal(kx, (B, L, D), jnp.float32)
    w1, b1, w2, b2 = init_params(kp, D, H)
    out = positionwise_feed_forward(x, w1, b1, w2, b2)
    out = jax.block_until_ready(out)
    ref = jnp.maximum(x @ w1 + b1[0], 0.0) @ w2 + b2[0]
    assert out.shape == (B, L, D)
    assert jnp.allclose(out, ref, atol=1e-4, rtol=1e-4)

    # Second check exercising ragged row tiles, hidden-dim tiling and the
    # accumulator/masking path (rows=100 with tile_m=32, H=200 with tile_h=128).
    B2, L2, D2, H2 = 2, 50, 128, 200
    x2 = jax.random.normal(kx2, (B2, L2, D2), jnp.float32)
    p2 = init_params(kp2, D2, H2)
    out2 = positionwise_feed_forward(x2, *p2, tile_m=32, tile_h=128)
    out2 = jax.block_until_ready(out2)
    ref2 = jnp.maximum(x2 @ p2[0] + p2[1][0], 0.0) @ p2[2] + p2[3][0]
    assert out2.shape == (B2, L2, D2)
    assert jnp.allclose(out2, ref2, atol=1e-4, rtol=1e-4)

    print("KERNEL_OK")
</pallas_src>

<mosaic_0001>
module attributes {stable_mosaic.version = 11 : i64} {
  func.func @_ffn_kernel(%arg0: i32, %arg1: i32, %arg2: memref<16x16xf32, #tpu.memory_space<vmem>>, %arg3: memref<16x32xf32, #tpu.memory_space<vmem>>, %arg4: memref<1x32xf32, #tpu.memory_space<vmem>>, %arg5: memref<32x16xf32, #tpu.memory_space<vmem>>, %arg6: memref<1x16xf32, #tpu.memory_space<vmem>>, %arg7: memref<16x16xf32, #tpu.memory_space<vmem>>, %arg8: memref<16x16xf32, #tpu.memory_space<vmem>>) attributes {dimension_semantics = [#tpu.dimension_semantics<parallel>, #tpu.dimension_semantics<arbitrary>], iteration_bounds = array<i64: 1, 1>, scalar_prefetch = 0 : i64, scratch_operands = 1 : i64, tpu.core_type = #tpu.core_type<tc>, window_params = [{transform_indices = @transform_0, window_bounds = array<i64: 16, 16>}, {transform_indices = @transform_1, window_bounds = array<i64: 16, 32>}, {transform_indices = @transform_2, window_bounds = array<i64: 1, 32>}, {transform_indices = @transform_3, window_bounds = array<i64: 32, 16>}, {pipeline_mode = #tpu.pipeline_mode<synchronous>, transform_indices = @transform_4, window_bounds = array<i64: 1, 16>}, {transform_indices = @transform_5, window_bounds = array<i64: 16, 16>}]} {
    %c0_i32 = arith.constant 0 : i32
    %0 = arith.cmpi eq, %arg1, %c0_i32 : i32
    %1 = arith.extui %0 : i1 to i32
    %c0_i32_0 = arith.constant 0 : i32
    %2 = arith.cmpi ne, %1, %c0_i32_0 : i32
    scf.if %2 {
      %cst_16 = arith.constant 0.000000e+00 : f32
      %19 = vector.broadcast %cst_16 : f32 to vector<16x16xf32>
      %c0_17 = arith.constant 0 : index
      %c0_18 = arith.constant 0 : index
      %20 = vector.load %arg8[%c0_17, %c0_18] : memref<16x16xf32, #tpu.memory_space<vmem>>, vector<16x16xf32>
      tpu.vector_store %arg8[%c0_17, %c0_18], %19 {strides = array<i32>} : memref<16x16xf32, #tpu.memory_space<vmem>>, vector<16x16xf32>,
    } else {
    }
    %c0 = arith.constant 0 : index
    %c0_1 = arith.constant 0 : index
    %3 = vector.load %arg2[%c0, %c0_1] : memref<16x16xf32, #tpu.memory_space<vmem>>, vector<16x16xf32>
    %c0_2 = arith.constant 0 : index
    %c0_3 = arith.constant 0 : index
    %4 = vector.load %arg3[%c0_2, %c0_3] : memref<16x32xf32, #tpu.memory_space<vmem>>, vector<16x32xf32>
    %cst = arith.constant dense<0.000000e+00> : vector<16x32xf32>
    %5 = tpu.matmul %3, %4, %cst {dimension_numbers = #tpu.dot_dimension_numbers<[1], [0], [0], [1], [0, 0, 1, 1], [], []>} : vector<16x16xf32>, vector<16x32xf32>, vector<16x32xf32> -> vector<16x32xf32>
    %c0_4 = arith.constant 0 : index
    %c0_5 = arith.constant 0 : index
    %6 = vector.load %arg4[%c0_4, %c0_5] : memref<1x32xf32, #tpu.memory_space<vmem>>, vector<1x32xf32>
    %7 = vector.broadcast %6 : vector<1x32xf32> to vector<16x32xf32>
    %8 = arith.addf %5, %7 : vector<16x32xf32>
    %cst_6 = arith.constant 0.000000e+00 : f32
    %9 = vector.broadcast %cst_6 : f32 to vector<16x32xf32>
    %10 = arith.maximumf %8, %9 : vector<16x32xf32>
    %c0_7 = arith.constant 0 : index
    %c0_8 = arith.constant 0 : index
    %11 = vector.load %arg5[%c0_7, %c0_8] : memref<32x16xf32, #tpu.memory_space<vmem>>, vector<32x16xf32>
    %c0_9 = arith.constant 0 : index
    %c0_10 = arith.constant 0 : index
    %12 = vector.load %arg8[%c0_9, %c0_10] : memref<16x16xf32, #tpu.memory_space<vmem>>, vector<16x16xf32>
    %cst_11 = arith.constant dense<0.000000e+00> : vector<16x16xf32>
    %13 = tpu.matmul %10, %11, %cst_11 {dimension_numbers = #tpu.dot_dimension_numbers<[1], [0], [0], [1], [0, 0, 1, 1], [], []>} : vector<16x32xf32>, vector<32x16xf32>, vector<16x16xf32> -> vector<16x16xf32>
    %14 = arith.addf %12, %13 : vector<16x16xf32>
    %c0_12 = arith.constant 0 : index
    %c0_13 = arith.constant 0 : index
    %15 = vector.load %arg8[%c0_12, %c0_13] : memref<16x16xf32, #tpu.memory_space<vmem>>, vector<16x16xf32>
    tpu.vector_store %arg8[%c0_12, %c0_13], %14 {strides = array<i32>} : memref<16x16xf32, #tpu.memory_space<vmem>>, vector<16x16xf32>,
    %c0_i32_14 = arith.constant 0 : i32
    %16 = arith.cmpi eq, %arg1, %c0_i32_14 : i32
    %17 = arith.extui %16 : i1 to i32
    %c0_i32_15 = arith.constant 0 : i32
    %18 = arith.cmpi ne, %17, %c0_i32_15 : i32
    scf.if %18 {
      %c0_16 = arith.constant 0 : index
      %c0_17 = arith.constant 0 : index
      %19 = vector.load %arg8[%c0_16, %c0_17] : memref<16x16xf32, #tpu.memory_space<vmem>>, vector<16x16xf32>
      %c0_18 = arith.constant 0 : index
      %c0_19 = arith.constant 0 : index
      %20 = vector.load %arg6[%c0_18, %c0_19] : memref<1x16xf32, #tpu.memory_space<vmem>>, vector<1x16xf32>
      %21 = vector.broadcast %20 : vector<1x16xf32> to vector<16x16xf32>
      %22 = arith.addf %19, %21 : vector<16x16xf32>
      %c0_20 = arith.constant 0 : index
      %c0_21 = arith.constant 0 : index
      %23 = vector.load %arg7[%c0_20, %c0_21] : memref<16x16xf32, #tpu.memory_space<vmem>>, vector<16x16xf32>
      tpu.vector_store %arg7[%c0_20, %c0_21], %22 {strides = array<i32>} : memref<16x16xf32, #tpu.memory_space<vmem>>, vector<16x16xf32>,
    } else {
    }
    return
  }
  func.func @transform_0(%arg0: i32, %arg1: i32) -> (i32, i32) {
    %c0_i32 = arith.constant 0 : i32
    %c0_i32_0 = arith.constant 0 : i32
    return %arg0, %c0_i32 : i32, i32
  }
  func.func @transform_1(%arg0: i32, %arg1: i32) -> (i32, i32) {
    %c0_i32 = arith.constant 0 : i32
    %c0_i32_0 = arith.constant 0 : i32
    return %c0_i32, %arg1 : i32, i32
  }
  func.func @transform_2(%arg0: i32, %arg1: i32) -> (i32, i32) {
    %c0_i32 = arith.constant 0 : i32
    %c0_i32_0 = arith.constant 0 : i32
    return %c0_i32, %arg1 : i32, i32
  }
  func.func @transform_3(%arg0: i32, %arg1: i32) -> (i32, i32) {
    %c0_i32 = arith.constant 0 : i32
    %c0_i32_0 = arith.constant 0 : i32
    return %arg1, %c0_i32 : i32, i32
  }
  func.func @transform_4(%arg0: i32, %arg1: i32) -> (i32, i32) {
    %c0_i32 = arith.constant 0 : i32
    %c0_i32_0 = arith.constant 0 : i32
    %c0_i32_1 = arith.constant 0 : i32
    return %c0_i32, %c0_i32_0 : i32, i32
  }
  func.func @transform_5(%arg0: i32, %arg1: i32) -> (i32, i32) {
    %c0_i32 = arith.constant 0 : i32
    %c0_i32_0 = arith.constant 0 : i32
    return %arg0, %c0_i32 : i32, i32
  }
}

</mosaic_0001>

<llo_original>
// kernel: positionwise_feed_forward.1
$region0: #{positionwise_feed_forward.1}
  #allocation0 [shape = 'u32[]', space=smem, size = 0x4, offset = 0x4, fixed_abs, tag = 'smem constant byte address 0x4 - core index']
  #allocation1 [shape = 'u32[144,128]{1,0:T(1,128)}', space=vmem, size = 0x12000, scoped, tag = 'internal scratch']
  #allocation2 [shape = 'f32[16,16]{1,0:T(8,128)}', space=vmem, size = 0x2000, scoped, tag = 'scratch operand']
  %s0 = inlined_call_operand.vmem [shape: f32[16,16], index: 0, kind: input, shape index: {}]
  %s1 = inlined_call_operand.vmem [shape: f32[16,32], index: 1, kind: input, shape index: {}]
  %s2 = inlined_call_operand.vmem [shape: f32[1,32], index: 2, kind: input, shape index: {}]
  %s3 = inlined_call_operand.vmem [shape: f32[32,16], index: 3, kind: input, shape index: {}]
  %s4 = inlined_call_operand.vmem [shape: f32[1,16], index: 4, kind: input, shape index: {}]
  %s5 = inlined_call_operand.hbm [shape: f32[16,16], index: 5, kind: output, shape index: {}]
  %s6 = sld [smem:[#allocation0]]
  $region38: #{positionwise_feed_forward.1} parent=0
    _
  %s8 = ssub.s32 1, %s6
  %s9 = scalar_select 0, %s8, %s6
  $region1: #{positionwise_feed_forward.1} parent=0
    #allocation3 [shape = 'u8[8192]{0}', space=vmem, size = 0x2000, scoped, tag = 'output window, operand 0, single buffered']
    #allocation4 [shape = 's32[1]{0}', space=sflag, size = 0x4, scoped, tag = 'scoped memory for positionwise_feed_forward.1']
    %10 = vsyncpa [#allocation4], 0
    // Predicated region
    $region2: #{positionwise_feed_forward.1} parent=1 // pred_check
      _
    $region3: #{positionwise_feed_forward.1} parent=1 // pred_check_branch
      %12 = sbr.rel (0) target = $region5
    $region4: #{positionwise_feed_forward.1} parent=1 // pred_region
      _
    $region5: #{positionwise_feed_forward.1} parent=1 // pred_fallthru
      _
    // Predicated region
    $region6: #{positionwise_feed_forward.1} parent=1 // pred_check
      _
    $region7: #{positionwise_feed_forward.1} parent=1 // pred_check_branch
      %14 = sbr.rel (0) target = $region9
    $region8: #{positionwise_feed_forward.1} parent=1 // pred_region
      _
    $region9: #{positionwise_feed_forward.1} parent=1 // pred_fallthru
      _
    // Predicated region
    $region10: #{positionwise_feed_forward.1} parent=1 // pred_check
      _
    $region11: #{positionwise_feed_forward.1} parent=1 // pred_check_branch
      %16 = sbr.rel (0) target = $region13
    $region12: #{positionwise_feed_forward.1} parent=1 // pred_region
      _
    $region13: #{positionwise_feed_forward.1} parent=1 // pred_fallthru
      _
    // Predicated region
    $region14: #{positionwise_feed_forward.1} parent=1 // pred_check
      _
    $region15: #{positionwise_feed_forward.1} parent=1 // pred_check_branch
      %18 = sbr.rel (0) target = $region17
    $region16: #{positionwise_feed_forward.1} parent=1 // pred_region
      _
    $region17: #{positionwise_feed_forward.1} parent=1 // pred_fallthru
      _
    // Predicated region
    $region18: #{positionwise_feed_forward.1} parent=1 // pred_check
      _
    $region19: #{positionwise_feed_forward.1} parent=1 // pred_check_branch
      %20 = sbr.rel (0) target = $region21
    $region20: #{positionwise_feed_forward.1} parent=1 // pred_region
      _
    $region21: #{positionwise_feed_forward.1} parent=1 // pred_fallthru
      _
    %p21 = scmp.eq.s32.totalorder 0, 0
    // Predicated region
    $region22: #{positionwise_feed_forward.1} parent=1 // pred_check
      %p22 = pneg %p21
    $region23: #{positionwise_feed_forward.1} parent=1 // pred_check_branch
      %24 = sbr.rel (%p22) target = $region25
    $region24: #{positionwise_feed_forward.1} parent=1 // pred_region
      %vm25 = vcmask 130048
      %26 = vst.msk [vmem:[#allocation2] sm:$0xff] %vm25, 0.0
      %27 = vst.msk [vmem:[#allocation2 + $0x8] sm:$0xff] %vm25, 0.0
    $region25: #{positionwise_feed_forward.1} parent=1 // pred_fallthru
      _
    %v28 = vld [vmem:[%s0] sm:$0xff]
    %v29 = vld [vmem:[%s0 + $0x8] sm:$0xff]
    %v30 = vld [vmem:[%s1] sm:$0xff]
    %v31 = vld [vmem:[%s1 + $0x8] sm:$0xff]
    %v32 = vld [vmem:[%s2] sm:$0x1]
    %v34 = vlaneseq
    %v35 = vshrl.u32 %v34, 7
    %v36 = vsub.s32 0, %v35
    %v37 = vrot.slane %v32, %v36
    %vm39 = vcmask 130048
    %v41 = vsel %vm39, %v28, 0
    %v44 = vsel %vm39, %v29, 0
    %46 = vmatprep.subr.mxu0 0.0
    %47 = vmatpush1.msra.mxu0 %v30
    %48 = vmatprep.subr.mxu0 0.0
    %49 = vmatpush1.msra.mxu0 %v31
    %50 = vmatprep.subr.mxu0 0.0
    %51 = vmatpush1.msra.mxu0 0.0
    %52 = vmatprep.subr.mxu0 0.0
    %53 = vmatpush1.msra.mxu0 0.0
    %54 = vmatprep.subr.mxu0 0.0
    %55 = vmatpush1.msra.mxu0 0.0
    %56 = vmatprep.subr.mxu0 0.0
    %57 = vmatpush1.msra.mxu0 0.0
    %58 = vmatprep.subr.mxu0 0.0
    %59 = vmatpush1.msra.mxu0 0.0
    %60 = vmatprep.subr.mxu0 0.0
    %61 = vmatpush1.msra.mxu0 0.0
    %62 = vmatprep.subr.mxu0 0.0
    %63 = vmatpush1.msra.mxu0 0.0
    %64 = vmatprep.subr.mxu0 0.0
    %65 = vmatpush1.msra.mxu0 0.0
    %66 = vmatprep.subr.mxu0 0.0
    %67 = vmatpush1.msra.mxu0 0.0
    %68 = vmatprep.subr.mxu0 0.0
    %69 = vmatpush1.msra.mxu0 0.0
    %70 = vmatprep.subr.mxu0 0.0
    %71 = vmatpush1.msra.mxu0 0.0
    %72 = vmatprep.subr.mxu0 0.0
    %73 = vmatpush1.msra.mxu0 0.0
    %74 = vmatprep.subr.mxu0 0.0
    %75 = vmatpush1.msra.mxu0 0.0
    %76 = vmatprep.subr.mxu0 0.0
    %77 = vmatpush1.msra.mxu0 0.0
    %78 = vmatprep.subr.mxu0 0.0
    %79 = vmatpush1.msra.mxu0 0.0
    %80 = vmatprep.subr.mxu0 0.0
    %81 = vmatpush1.msra.mxu0 0.0
    %82 = vmatprep.subr.mxu0 0.0
    %83 = vmatpush1.msra.mxu0 0.0
    %84 = vmatprep.subr.mxu0 0.0
    %85 = vmatpush1.msra.mxu0 0.0
    %86 = vmatprep.subr.mxu0 0.0
    %87 = vmatpush1.msra.mxu0 0.0
    %88 = vmatprep.subr.mxu0 0.0
    %89 = vmatpush1.msra.mxu0 0.0
    %90 = vmatprep.subr.mxu0 0.0
    %91 = vmatpush1.msra.mxu0 0.0
    %92 = vmatprep.subr.mxu0 0.0
    %93 = vmatpush1.msra.mxu0 0.0
    %94 = vmatprep.subr.mxu0 0.0
    %95 = vmatpush1.msra.mxu0 0.0
    %96 = vmatprep.subr.mxu0 0.0
    %97 = vmatpush1.msra.mxu0 0.0
    %98 = vmatprep.subr.mxu0 0.0
    %99 = vmatpush1.msra.mxu0 0.0
    %100 = vmatprep.subr.mxu0 0.0
    %101 = vmatpush1.msra.mxu0 0.0
    %102 = vmatprep.subr.mxu0 0.0
    %103 = vmatpush1.msra.mxu0 0.0
    %104 = vmatprep.subr.mxu0 0.0
    %105 = vmatpush1.msra.mxu0 0.0
    %106 = vmatprep.subr.mxu0 0.0
    %107 = vmatpush1.msra.mxu0 0.0
    %108 = vmatprep.subr.mxu0 0.0
    %109 = vmatpush1.msra.mxu0 0.0
    %110 = vmatprep.mubr.f32.mxu0 0.0
    %111 = vmatmul.mubr.f32.gmra.mrb[0].mxu0 %v41
    %v112 = vpop.f32.mrb[0].mxu0
    %v113 = vadd.f32 %v37, %v112
    %v114 = vpop.f32.mrb[0].mxu0
    %115 = vmatprep.mubr.f32.mxu0 0.0
    %116 = vmatmul.mubr.f32.gmra.mrb[0].mxu0 %v44
    %v117 = vpop.f32.mrb[0].mxu0
    %v118 = vadd.f32 %v37, %v117
    %v119 = vpop.f32.mrb[0].mxu0
    %120 = vdwg.mxu0
    %v121 = vmax.f32 %v113, 0.0
    %v122 = vmax.f32 %v118, 0.0
    %v123 = vld [vmem:[%s3] sm:$0xff]
    %v124 = vld [vmem:[%s3 + $0x8] sm:$0xff]
    %v125 = vld [vmem:[%s3 + $0x10] sm:$0xff]
    %v126 = vld [vmem:[%s3 + $0x18] sm:$0xff]
    %v127 = vld [vmem:[#allocation2] sm:$0xff]
    %v128 = vld [vmem:[#allocation2 + $0x8] sm:$0xff]
    %vm129 = vcmask 261120
    %v131 = vsel %vm129, %v121, 0
    %v134 = vsel %vm129, %v122, 0
    %136 = vmatprep.subr.mxu0 0.0
    %137 = vmatpush1.msra.mxu0 %v123
    %138 = vmatprep.subr.mxu0 0.0
    %139 = vmatpush1.msra.mxu0 %v124
    %140 = vmatprep.subr.mxu0 0.0
    %141 = vmatpush1.msra.mxu0 %v125
    %142 = vmatprep.subr.mxu0 0.0
    %143 = vmatpush1.msra.mxu0 %v126
    %144 = vmatprep.subr.mxu0 0.0
    %145 = vmatpush1.msra.mxu0 0.0
    %146 = vmatprep.subr.mxu0 0.0
    %147 = vmatpush1.msra.mxu0 0.0
    %148 = vmatprep.subr.mxu0 0.0
    %149 = vmatpush1.msra.mxu0 0.0
    %150 = vmatprep.subr.mxu0 0.0
    %151 = vmatpush1.msra.mxu0 0.0
    %152 = vmatprep.subr.mxu0 0.0
    %153 = vmatpush1.msra.mxu0 0.0
    %154 = vmatprep.subr.mxu0 0.0
    %155 = vmatpush1.msra.mxu0 0.0
    %156 = vmatprep.subr.mxu0 0.0
    %157 = vmatpush1.msra.mxu0 0.0
    %158 = vmatprep.subr.mxu0 0.0
    %159 = vmatpush1.msra.mxu0 0.0
    %160 = vmatprep.subr.mxu0 0.0
    %161 = vmatpush1.msra.mxu0 0.0
    %162 = vmatprep.subr.mxu0 0.0
    %163 = vmatpush1.msra.mxu0 0.0
    %164 = vmatprep.subr.mxu0 0.0
    %165 = vmatpush1.msra.mxu0 0.0
    %166 = vmatprep.subr.mxu0 0.0
    %167 = vmatpush1.msra.mxu0 0.0
    %168 = vmatprep.subr.mxu0 0.0
    %169 = vmatpush1.msra.mxu0 0.0
    %170 = vmatprep.subr.mxu0 0.0
    %171 = vmatpush1.msra.mxu0 0.0
    %172 = vmatprep.subr.mxu0 0.0
    %173 = vmatpush1.msra.mxu0 0.0
    %174 = vmatprep.subr.mxu0 0.0
    %175 = vmatpush1.msra.mxu0 0.0
    %176 = vmatprep.subr.mxu0 0.0
    %177 = vmatpush1.msra.mxu0 0.0
    %178 = vmatprep.subr.mxu0 0.0
    %179 = vmatpush1.msra.mxu0 0.0
    %180 = vmatprep.subr.mxu0 0.0
    %181 = vmatpush1.msra.mxu0 0.0
    %182 = vmatprep.subr.mxu0 0.0
    %183 = vmatpush1.msra.mxu0 0.0
    %184 = vmatprep.subr.mxu0 0.0
    %185 = vmatpush1.msra.mxu0 0.0
    %186 = vmatprep.subr.mxu0 0.0
    %187 = vmatpush1.msra.mxu0 0.0
    %188 = vmatprep.subr.mxu0 0.0
    %189 = vmatpush1.msra.mxu0 0.0
    %190 = vmatprep.subr.mxu0 0.0
    %191 = vmatpush1.msra.mxu0 0.0
    %192 = vmatprep.subr.mxu0 0.0
    %193 = vmatpush1.msra.mxu0 0.0
    %194 = vmatprep.subr.mxu0 0.0
    %195 = vmatpush1.msra.mxu0 0.0
    %196 = vmatprep.subr.mxu0 0.0
    %197 = vmatpush1.msra.mxu0 0.0
    %198 = vmatprep.subr.mxu0 0.0
    %199 = vmatpush1.msra.mxu0 0.0
    %200 = vmatprep.mubr.f32.mxu0 0.0
    %201 = vmatmul.mubr.f32.gmra.mrb[0].mxu0 %v131
    %v202 = vpop.f32.mrb[0].mxu0
    %v203 = vadd.f32 0.0, %v202
    %v204 = vpop.f32.mrb[0].mxu0
    %205 = vmatprep.mubr.f32.mxu0 0.0
    %206 = vmatmul.mubr.f32.gmra.mrb[0].mxu0 %v134
    %v207 = vpop.f32.mrb[0].mxu0
    %v208 = vadd.f32 0.0, %v207
    %v209 = vpop.f32.mrb[0].mxu0
    %210 = vdwg.mxu0
    %v211 = vadd.f32 %v127, %v203
    %v212 = vadd.f32 %v128, %v208
    %213 = vst.msk [vmem:[#allocation2] sm:$0xff] %vm39, %v211
    %214 = vst.msk [vmem:[#allocation2 + $0x8] sm:$0xff] %vm39, %v212
    // Predicated region
    $region26: #{positionwise_feed_forward.1} parent=1 // pred_check
      %p215 = pneg %p21
    $region27: #{positionwise_feed_forward.1} parent=1 // pred_check_branch
      %217 = sbr.rel (%p215) target = $region29
    $region28: #{positionwise_feed_forward.1} parent=1 // pred_region
      %v218 = vld [vmem:[#allocation2] sm:$0xff]
      %v219 = vld [vmem:[#allocation2 + $0x8] sm:$0xff]
      %v220 = vld [vmem:[%s4] sm:$0x1]
      %v222 = vlaneseq
      %v223 = vshrl.u32 %v222, 7
      %v224 = vsub.s32 0, %v223
      %v225 = vrot.slane %v220, %v224
      %v227 = vadd.f32 %v218, %v225
      %v228 = vadd.f32 %v219, %v225
      %229 = vst.msk [vmem:[#allocation3] sm:$0xff] %vm39, %v227
      %230 = vst.msk [vmem:[#allocation3 + $0x8] sm:$0xff] %vm39, %v228
    $region29: #{positionwise_feed_forward.1} parent=1 // pred_fallthru
      _
    // Predicated region
    $region30: #{positionwise_feed_forward.1} parent=1 // pred_check
      _
    $region31: #{positionwise_feed_forward.1} parent=1 // pred_check_branch
      %232 = sbr.rel (0) target = $region33
    $region32: #{positionwise_feed_forward.1} parent=1 // pred_region
      %s234 = ssub.s32 256, 256
      %235 = vsyncadd [#allocation4], %s234
      %s236 = sshll.u32 [#allocation3], 4
      %s237 = int_to_ptr.vmem [resolvable:$true] %s236
      %242 = dma.vmem_to_hbm [thread:$0]  %s237, 256, %s5, [#allocation4], 128, 128, 8
    $region33: #{positionwise_feed_forward.1} parent=1 // pred_fallthru
      _
    // Predicated region
    $region34: #{positionwise_feed_forward.1} parent=1 // pred_check
      _
    $region35: #{positionwise_feed_forward.1} parent=1 // pred_check_branch
      %244 = sbr.rel (0) target = $region37
    $region36: #{positionwise_feed_forward.1} parent=1 // pred_region
      %245 = dma.done [#allocation4], 256
    $region37: #{positionwise_feed_forward.1} parent=1 // pred_fallthru
      _
    %246 = vsyncpa [#allocation4], 1

</llo_original>
